<compile_context>
chip_gen: v6e
topology: v6e:2x2x1
jax: 0.10.0
libtpu: 0.0.40
codegen_flags: <defaults>
</compile_context>

<pallas_src>
import functools

import jax
import jax.numpy as jnp
from jax.experimental import pallas as pl
from jax.experimental.pallas import tpu as pltpu

BN_EPS = 1e-5
_LANE = 128
_VMEM_LIMIT = 32 * 1024 * 1024   # valid on v5e/v6e/v7x; actual usage is a few MiB


def _round_up(x, m):
    return ((x + m - 1) // m) * m


def _pick_batch_tile(n, l, max_rows):
    """Largest Nb dividing N with Nb*L <= max_rows and sublane-aligned rows."""
    for nb in range(n, 0, -1):
        if n % nb == 0 and nb * l <= max_rows and (nb * l) % 8 == 0:
            return nb
    return n   # fall back to a single full-size tile (block == array is always legal)


def _row_masks(rows, L, dtype):
    # (rows, 1) boundary masks, computed once per tile and reused by both convs:
    # zero the l-1 tap at l == 0 and the l+1 tap at l == L-1.
    pos = jax.lax.broadcasted_iota(jnp.int32, (rows, 1), 0) % L
    return (pos != 0).astype(dtype), (pos != L - 1).astype(dtype)


def _tap_concat(v, m_first, m_last):
    # Build [v_{l-1} | v_l | v_{l+1}] along lanes so a k=3 conv is ONE matmul.
    rows = v.shape[0]
    prev = pltpu.roll(v, shift=1, axis=0) * m_first          # v[l-1], zeroed at l==0
    nxt = pltpu.roll(v, shift=rows - 1, axis=0) * m_last     # v[l+1], zeroed at l==L-1
    return jnp.concatenate([prev, v, nxt], axis=1)


def _make_stats_kernel(L):
    def kernel(x_ref, w1_ref, acc_ref):
        x = x_ref[...]                                        # (TR, Cin) f32
        m_first, m_last = _row_masks(x.shape[0], L, jnp.float32)
        h0 = jnp.dot(_tap_concat(x, m_first, m_last), w1_ref[...],
                     preferred_element_type=jnp.float32)      # (TR, Cpad)
        partial = jnp.concatenate(
            [jnp.sum(h0, axis=0, keepdims=True),
             jnp.sum(h0 * h0, axis=0, keepdims=True)], axis=0)  # (2, Cpad)

        @pl.when(pl.program_id(0) == 0)
        def _init():
            acc_ref[...] = jnp.zeros_like(acc_ref)

        acc_ref[...] += partial
    return kernel


def _make_main_kernel(L):
    def kernel(x_ref, w1_ref, shift_ref, w2_ref, bout_ref, o_ref):
        x = x_ref[...]                                        # (TR, Cin) f32
        m_first, m_last = _row_masks(x.shape[0], L, jnp.float32)
        # conv1 (taps fused, BN scale pre-folded into w1) + BN shift + ReLU.
        h = jnp.dot(_tap_concat(x, m_first, m_last), w1_ref[...],
                    preferred_element_type=jnp.float32)       # (TR, Cpad)
        h = jnp.maximum(h + shift_ref[...], 0.0)
        # conv2 (taps fused) + 1x1 skip (fused via +x/-x pass-through columns).
        y = jnp.dot(_tap_concat(h, m_first, m_last), w2_ref[...],
                    preferred_element_type=jnp.float32)       # (TR, C2pad)
        o_ref[...] = (y + bout_ref[...]).astype(o_ref.dtype)
    return kernel


@functools.partial(jax.jit, static_argnames=("max_rows_per_block",))
def ladder_block_pallas(x_ncl, params, max_rows_per_block=512):
    """x_ncl: (N, Cin, L) float32 in PyTorch NCL convention."""
    N, Cin, L = x_ncl.shape
    Cout = params["w1"].shape[0]
    C2 = 2 * Cout
    rows = N * L

    # NCL -> channels-last (N*L, Cin) slab.
    x2d = jnp.transpose(x_ncl, (0, 2, 1)).reshape(rows, Cin).astype(jnp.float32)

    # Lane-pad hidden / output channels; reserve 2*Cin hidden columns that carry
    # +x and -x through BN(identity)+ReLU so the skip conv fuses into conv2.
    Cpad = _round_up(Cout + 2 * Cin, _LANE)
    C2pad = _round_up(C2, _LANE)
    nb = _pick_batch_tile(N, L, max_rows_per_block)
    tile_rows = nb * L
    num_tiles = N // nb

    # conv1 weights (Cout, Cin, 3) -> fused tap-major (3*Cin, Cpad), augmented.
    w1_taps = jnp.transpose(params["w1"], (2, 1, 0))            # (3, Cin, Cout)
    eye = jnp.eye(Cin, dtype=jnp.float32)
    w1f = jnp.zeros((3, Cin, Cpad), jnp.float32)
    w1f = w1f.at[:, :, :Cout].set(w1_taps)
    w1f = w1f.at[1, :, Cout:Cout + Cin].set(eye)                # +x pass-through
    w1f = w1f.at[1, :, Cout + Cin:Cout + 2 * Cin].set(-eye)     # -x pass-through
    w1f = w1f.reshape(3 * Cin, Cpad)

    # ---- pass 1: accumulate per-channel sum / sumsq of conv1 pre-activation ----
    sums = pl.pallas_call(
        _make_stats_kernel(L),
        out_shape=jax.ShapeDtypeStruct((2, Cpad), jnp.float32),
        grid=(num_tiles,),
        in_specs=[pl.BlockSpec((tile_rows, Cin), lambda i: (i, 0)),
                  pl.BlockSpec((3 * Cin, Cpad), lambda i: (0, 0))],
        out_specs=pl.BlockSpec((2, Cpad), lambda i: (0, 0)),
        compiler_params=pltpu.CompilerParams(
            dimension_semantics=("arbitrary",),
            vmem_limit_bytes=_VMEM_LIMIT),
    )(x2d, w1f)

    # Training-mode BN (biased variance) folded into conv1 weights + one shift.
    cnt = jnp.float32(rows)
    mean0 = sums[0] / cnt
    var0 = jnp.maximum(sums[1] / cnt - mean0 * mean0, 0.0)
    invstd = jax.lax.rsqrt(var0[:Cout] + BN_EPS)
    scale_c = params["gamma"] * invstd
    # Note: the conv1 bias cancels exactly under training-mode BN (mean subtraction).
    shift_c = params["beta"] - mean0[:Cout] * scale_c
    scale_full = jnp.zeros((Cpad,), jnp.float32).at[:Cout].set(scale_c)
    scale_full = scale_full.at[Cout:Cout + 2 * Cin].set(1.0)    # keep +-x intact
    shift_row = jnp.zeros((1, Cpad), jnp.float32).at[0, :Cout].set(shift_c)
    w1fs = w1f * scale_full[None, :]

    # conv2 + skip weights -> fused tap-major (3*Cpad, C2pad).
    w2_taps = jnp.transpose(params["w2"], (2, 1, 0))            # (3, Cout, C2)
    wskip_t = jnp.transpose(params["wskip"][:, :, 0], (1, 0))   # (Cin, C2)
    w2f = jnp.zeros((3, Cpad, C2pad), jnp.float32)
    w2f = w2f.at[:, :Cout, :C2].set(w2_taps)
    w2f = w2f.at[1, Cout:Cout + Cin, :C2].set(wskip_t)              # + relu(x)  @ Wskip
    w2f = w2f.at[1, Cout + Cin:Cout + 2 * Cin, :C2].set(-wskip_t)   # - relu(-x) @ Wskip
    w2f = w2f.reshape(3 * Cpad, C2pad)
    bout = jnp.zeros((1, C2pad), jnp.float32).at[0, :C2].set(
        params["b2"] + params["bskip"])

    flops = 2 * rows * (3 * Cin * Cpad + 3 * Cpad * C2pad)
    bytes_accessed = 4 * (rows * Cin + rows * C2pad
                          + 3 * Cin * Cpad + 3 * Cpad * C2pad + Cpad + C2pad)

    # ---- pass 2: embarrassingly parallel over row tiles ----
    out2d = pl.pallas_call(
        _make_main_kernel(L),
        out_shape=jax.ShapeDtypeStruct((rows, C2pad), jnp.float32),
        grid=(num_tiles,),
        in_specs=[pl.BlockSpec((tile_rows, Cin), lambda i: (i, 0)),
                  pl.BlockSpec((3 * Cin, Cpad), lambda i: (0, 0)),
                  pl.BlockSpec((1, Cpad), lambda i: (0, 0)),
                  pl.BlockSpec((3 * Cpad, C2pad), lambda i: (0, 0)),
                  pl.BlockSpec((1, C2pad), lambda i: (0, 0))],
        out_specs=pl.BlockSpec((tile_rows, C2pad), lambda i: (i, 0)),
        compiler_params=pltpu.CompilerParams(
            dimension_semantics=("parallel",),
            vmem_limit_bytes=_VMEM_LIMIT),
        cost_estimate=pl.CostEstimate(
            flops=flops, transcendentals=0, bytes_accessed=bytes_accessed),
    )(x2d, w1fs, shift_row, w2f, bout)

    # (N*L, C2pad) -> slice padding -> (N, 2*Cout, L)
    return jnp.transpose(out2d[:, :C2].reshape(N, L, C2), (0, 2, 1))


def ladder_block_reference(x_ncl, params):
    """Pure-JAX reference mirroring the PyTorch forward (training-mode BN)."""
    def conv1d(x, w, b, pad):
        y = jax.lax.conv_general_dilated(
            x, w, window_strides=(1,), padding=[(pad, pad)],
            dimension_numbers=("NCH", "OIH", "NCH"))
        return y + b[None, :, None]

    h = conv1d(x_ncl, params["w1"], params["b1"], 1)
    mean = jnp.mean(h, axis=(0, 2), keepdims=True)
    var = jnp.mean((h - mean) ** 2, axis=(0, 2), keepdims=True)
    h = (h - mean) / jnp.sqrt(var + BN_EPS)
    h = h * params["gamma"][None, :, None] + params["beta"][None, :, None]
    h = jnp.maximum(h, 0.0)
    y = conv1d(h, params["w2"], params["b2"], 1)
    s = conv1d(x_ncl, params["wskip"], params["bskip"], 0)
    return y + s


if __name__ == "__main__":
    N, Cin, Cout, L = 4, 4, 8, 16

    key = jax.random.PRNGKey(0)
    ks = jax.random.split(key, 9)
    params = {
        "w1":    0.2 * jax.random.normal(ks[0], (Cout, Cin, 3), jnp.float32),
        "b1":    0.1 * jax.random.normal(ks[1], (Cout,), jnp.float32),
        "gamma": 1.0 + 0.1 * jax.random.normal(ks[2], (Cout,), jnp.float32),
        "beta":  0.1 * jax.random.normal(ks[3], (Cout,), jnp.float32),
        "w2":    0.2 * jax.random.normal(ks[4], (2 * Cout, Cout, 3), jnp.float32),
        "b2":    0.1 * jax.random.normal(ks[5], (2 * Cout,), jnp.float32),
        "wskip": 0.2 * jax.random.normal(ks[6], (2 * Cout, Cin, 1), jnp.float32),
        "bskip": 0.1 * jax.random.normal(ks[7], (2 * Cout,), jnp.float32),
    }
    x = jax.random.normal(ks[8], (N, Cin, L), jnp.float32)

    # max_rows_per_block=32 -> 2 row tiles: exercises the stats accumulator and
    # the parallel main grid even at this toy size.
    out = jax.block_until_ready(
        ladder_block_pallas(x, params, max_rows_per_block=32))
    ref = jax.block_until_ready(ladder_block_reference(x, params))

    assert out.shape == (N, 2 * Cout, L), out.shape
    max_err = float(jnp.max(jnp.abs(out - ref)))
    assert jnp.allclose(out, ref, atol=5e-4, rtol=5e-4), max_err

    print("KERNEL_OK")
</pallas_src>

<mosaic_0001>
module attributes {stable_mosaic.version = 11 : i64} {
  func.func @kernel(%arg0: i32, %arg1: memref<32x4xf32, #tpu.memory_space<vmem>>, %arg2: memref<12x128xf32, #tpu.memory_space<vmem>>, %arg3: memref<2x128xf32, #tpu.memory_space<vmem>>) attributes {dimension_semantics = [#tpu.dimension_semantics<arbitrary>], iteration_bounds = array<i64: 2>, scalar_prefetch = 0 : i64, scratch_operands = 0 : i64, tpu.core_type = #tpu.core_type<tc>, window_params = [{transform_indices = @transform_0, window_bounds = array<i64: 32, 4>}, {pipeline_mode = #tpu.pipeline_mode<synchronous>, transform_indices = @transform_1, window_bounds = array<i64: 12, 128>}, {pipeline_mode = #tpu.pipeline_mode<synchronous>, transform_indices = @transform_2, window_bounds = array<i64: 2, 128>}]} {
    %c0 = arith.constant 0 : index
    %c0_0 = arith.constant 0 : index
    %0 = vector.load %arg1[%c0, %c0_0] : memref<32x4xf32, #tpu.memory_space<vmem>>, vector<32x4xf32>
    %1 = tpu.iota {dimensions = array<i32: 0>} : vector<32x1xi32>
    %c16_i32 = arith.constant 16 : i32
    %c0_i32 = arith.constant 0 : i32
    %2 = arith.cmpi eq, %c16_i32, %c0_i32 : i32
    %c1_i32 = arith.constant 1 : i32
    %3 = arith.select %2, %c1_i32, %c16_i32 : i32
    %4 = vector.broadcast %3 : i32 to vector<32x1xi32>
    %5 = arith.remsi %1, %4 : vector<32x1xi32>
    %c0_i32_1 = arith.constant 0 : i32
    %6 = vector.broadcast %c0_i32_1 : i32 to vector<32x1xi32>
    %7 = arith.cmpi ne, %5, %6 : vector<32x1xi32>
    %c0_i32_2 = arith.constant 0 : i32
    %8 = vector.broadcast %c0_i32_2 : i32 to vector<32x1xi32>
    %9 = arith.cmpi slt, %5, %8 : vector<32x1xi32>
    %c0_i32_3 = arith.constant 0 : i32
    %10 = arith.cmpi slt, %3, %c0_i32_3 : i32
    %11 = vector.broadcast %10 : i1 to vector<32x1xi1>
    %12 = vector.broadcast %11 : vector<32x1xi1> to vector<32x1xi1>
    %13 = arith.xori %9, %12 : vector<32x1xi1>
    %14 = arith.andi %13, %7 : vector<32x1xi1>
    %15 = vector.broadcast %3 : i32 to vector<32x1xi32>
    %16 = arith.addi %5, %15 : vector<32x1xi32>
    %17 = arith.select %14, %16, %5 : vector<32x1xi1>, vector<32x1xi32>
    %c0_i32_4 = arith.constant 0 : i32
    %18 = vector.broadcast %c0_i32_4 : i32 to vector<32x1xi32>
    %19 = arith.cmpi ne, %17, %18 : vector<32x1xi32>
    %20 = arith.extui %19 : vector<32x1xi1> to vector<32x1xi32>
    %21 = arith.sitofp %20 : vector<32x1xi32> to vector<32x1xf32>
    %c15_i32 = arith.constant 15 : i32
    %22 = vector.broadcast %c15_i32 : i32 to vector<32x1xi32>
    %23 = arith.cmpi ne, %17, %22 : vector<32x1xi32>
    %24 = arith.extui %23 : vector<32x1xi1> to vector<32x1xi32>
    %25 = arith.sitofp %24 : vector<32x1xi32> to vector<32x1xf32>
    %c1_i32_5 = arith.constant 1 : i32
    %26 = tpu.dynamic_rotate %0 by %c1_i32_5 dim 0 : vector<32x4xf32>, i32 -> vector<32x4xf32>
    %27 = vector.broadcast %21 : vector<32x1xf32> to vector<32x4xf32>
    %28 = arith.mulf %26, %27 : vector<32x4xf32>
    %c31_i32 = arith.constant 31 : i32
    %29 = tpu.dynamic_rotate %0 by %c31_i32 dim 0 : vector<32x4xf32>, i32 -> vector<32x4xf32>
    %30 = vector.broadcast %25 : vector<32x1xf32> to vector<32x4xf32>
    %31 = arith.mulf %29, %30 : vector<32x4xf32>
    %32 = tpu.concatenate %28, %0, %31 in 1 : vector<32x4xf32>, vector<32x4xf32>, vector<32x4xf32> -> vector<32x12xf32>
    %c0_6 = arith.constant 0 : index
    %c0_7 = arith.constant 0 : index
    %33 = vector.load %arg2[%c0_6, %c0_7] : memref<12x128xf32, #tpu.memory_space<vmem>>, vector<12x128xf32>
    %cst = arith.constant dense<0.000000e+00> : vector<32x128xf32>
    %34 = tpu.matmul %32, %33, %cst {dimension_numbers = #tpu.dot_dimension_numbers<[1], [0], [0], [1], [0, 0, 1, 1], [], []>} : vector<32x12xf32>, vector<12x128xf32>, vector<32x128xf32> -> vector<32x128xf32>
    %cst_8 = arith.constant dense<0.000000e+00> : vector<128xf32>
    %35 = vector.multi_reduction <add>, %34, %cst_8 [0] : vector<32x128xf32> to vector<128xf32>
    %36 = vector.shape_cast %35 : vector<128xf32> to vector<1x128xf32>
    %37 = arith.mulf %34, %34 : vector<32x128xf32>
    %cst_9 = arith.constant dense<0.000000e+00> : vector<128xf32>
    %38 = vector.multi_reduction <add>, %37, %cst_9 [0] : vector<32x128xf32> to vector<128xf32>
    %39 = vector.shape_cast %38 : vector<128xf32> to vector<1x128xf32>
    %40 = tpu.concatenate %36, %39 in 0 : vector<1x128xf32>, vector<1x128xf32> -> vector<2x128xf32>
    %c0_i32_10 = arith.constant 0 : i32
    %41 = arith.cmpi eq, %arg0, %c0_i32_10 : i32
    %42 = arith.extui %41 : i1 to i32
    %c0_i32_11 = arith.constant 0 : i32
    %43 = arith.cmpi ne, %42, %c0_i32_11 : i32
    scf.if %43 {
      %cst_16 = arith.constant 0.000000e+00 : f32
      %47 = vector.broadcast %cst_16 : f32 to vector<2x128xf32>
      %c0_17 = arith.constant 0 : index
      %c0_18 = arith.constant 0 : index
      %48 = vector.load %arg3[%c0_17, %c0_18] : memref<2x128xf32, #tpu.memory_space<vmem>>, vector<2x128xf32>
      tpu.vector_store %arg3[%c0_17, %c0_18], %47 {strides = array<i32>} : memref<2x128xf32, #tpu.memory_space<vmem>>, vector<2x128xf32>,
    } else {
    }
    %c0_12 = arith.constant 0 : index
    %c0_13 = arith.constant 0 : index
    %44 = vector.load %arg3[%c0_12, %c0_13] : memref<2x128xf32, #tpu.memory_space<vmem>>, vector<2x128xf32>
    %45 = arith.addf %44, %40 : vector<2x128xf32>
    %c0_14 = arith.constant 0 : index
    %c0_15 = arith.constant 0 : index
    %46 = vector.load %arg3[%c0_14, %c0_15] : memref<2x128xf32, #tpu.memory_space<vmem>>, vector<2x128xf32>
    tpu.vector_store %arg3[%c0_14, %c0_15], %45 {strides = array<i32>} : memref<2x128xf32, #tpu.memory_space<vmem>>, vector<2x128xf32>,
    return
  }
  func.func @transform_0(%arg0: i32) -> (i32, i32) {
    %c0_i32 = arith.constant 0 : i32
    %c0_i32_0 = arith.constant 0 : i32
    return %arg0, %c0_i32 : i32, i32
  }
  func.func @transform_1(%arg0: i32) -> (i32, i32) {
    %c0_i32 = arith.constant 0 : i32
    %c0_i32_0 = arith.constant 0 : i32
    %c0_i32_1 = arith.constant 0 : i32
    return %c0_i32, %c0_i32_0 : i32, i32
  }
  func.func @transform_2(%arg0: i32) -> (i32, i32) {
    %c0_i32 = arith.constant 0 : i32
    %c0_i32_0 = arith.constant 0 : i32
    %c0_i32_1 = arith.constant 0 : i32
    return %c0_i32, %c0_i32_0 : i32, i32
  }
}

module attributes {stable_mosaic.version = 11 : i64} {
  func.func @kernel(%arg0: i32, %arg1: memref<32x4xf32, #tpu.memory_space<vmem>>, %arg2: memref<12x128xf32, #tpu.memory_space<vmem>>, %arg3: memref<1x128xf32, #tpu.memory_space<vmem>>, %arg4: memref<384x128xf32, #tpu.memory_space<vmem>>, %arg5: memref<1x128xf32, #tpu.memory_space<vmem>>, %arg6: memref<32x128xf32, #tpu.memory_space<vmem>>) attributes {dimension_semantics = [#tpu.dimension_semantics<parallel>], iteration_bounds = array<i64: 2>, scalar_prefetch = 0 : i64, scratch_operands = 0 : i64, tpu.core_type = #tpu.core_type<tc>, window_params = [{transform_indices = @transform_0, window_bounds = array<i64: 32, 4>}, {pipeline_mode = #tpu.pipeline_mode<synchronous>, transform_indices = @transform_1, window_bounds = array<i64: 12, 128>}, {pipeline_mode = #tpu.pipeline_mode<synchronous>, transform_indices = @transform_2, window_bounds = array<i64: 1, 128>}, {pipeline_mode = #tpu.pipeline_mode<synchronous>, transform_indices = @transform_3, window_bounds = array<i64: 384, 128>}, {pipeline_mode = #tpu.pipeline_mode<synchronous>, transform_indices = @transform_4, window_bounds = array<i64: 1, 128>}, {transform_indices = @transform_5, window_bounds = array<i64: 32, 128>}]} {
    %c0 = arith.constant 0 : index
    %c0_0 = arith.constant 0 : index
    %0 = vector.load %arg1[%c0, %c0_0] : memref<32x4xf32, #tpu.memory_space<vmem>>, vector<32x4xf32>
    %1 = tpu.iota {dimensions = array<i32: 0>} : vector<32x1xi32>
    %c16_i32 = arith.constant 16 : i32
    %c0_i32 = arith.constant 0 : i32
    %2 = arith.cmpi eq, %c16_i32, %c0_i32 : i32
    %c1_i32 = arith.constant 1 : i32
    %3 = arith.select %2, %c1_i32, %c16_i32 : i32
    %4 = vector.broadcast %3 : i32 to vector<32x1xi32>
    %5 = arith.remsi %1, %4 : vector<32x1xi32>
    %c0_i32_1 = arith.constant 0 : i32
    %6 = vector.broadcast %c0_i32_1 : i32 to vector<32x1xi32>
    %7 = arith.cmpi ne, %5, %6 : vector<32x1xi32>
    %c0_i32_2 = arith.constant 0 : i32
    %8 = vector.broadcast %c0_i32_2 : i32 to vector<32x1xi32>
    %9 = arith.cmpi slt, %5, %8 : vector<32x1xi32>
    %c0_i32_3 = arith.constant 0 : i32
    %10 = arith.cmpi slt, %3, %c0_i32_3 : i32
    %11 = vector.broadcast %10 : i1 to vector<32x1xi1>
    %12 = vector.broadcast %11 : vector<32x1xi1> to vector<32x1xi1>
    %13 = arith.xori %9, %12 : vector<32x1xi1>
    %14 = arith.andi %13, %7 : vector<32x1xi1>
    %15 = vector.broadcast %3 : i32 to vector<32x1xi32>
    %16 = arith.addi %5, %15 : vector<32x1xi32>
    %17 = arith.select %14, %16, %5 : vector<32x1xi1>, vector<32x1xi32>
    %c0_i32_4 = arith.constant 0 : i32
    %18 = vector.broadcast %c0_i32_4 : i32 to vector<32x1xi32>
    %19 = arith.cmpi ne, %17, %18 : vector<32x1xi32>
    %20 = arith.extui %19 : vector<32x1xi1> to vector<32x1xi32>
    %21 = arith.sitofp %20 : vector<32x1xi32> to vector<32x1xf32>
    %c15_i32 = arith.constant 15 : i32
    %22 = vector.broadcast %c15_i32 : i32 to vector<32x1xi32>
    %23 = arith.cmpi ne, %17, %22 : vector<32x1xi32>
    %24 = arith.extui %23 : vector<32x1xi1> to vector<32x1xi32>
    %25 = arith.sitofp %24 : vector<32x1xi32> to vector<32x1xf32>
    %c1_i32_5 = arith.constant 1 : i32
    %26 = tpu.dynamic_rotate %0 by %c1_i32_5 dim 0 : vector<32x4xf32>, i32 -> vector<32x4xf32>
    %27 = vector.broadcast %21 : vector<32x1xf32> to vector<32x4xf32>
    %28 = arith.mulf %26, %27 : vector<32x4xf32>
    %c31_i32 = arith.constant 31 : i32
    %29 = tpu.dynamic_rotate %0 by %c31_i32 dim 0 : vector<32x4xf32>, i32 -> vector<32x4xf32>
    %30 = vector.broadcast %25 : vector<32x1xf32> to vector<32x4xf32>
    %31 = arith.mulf %29, %30 : vector<32x4xf32>
    %32 = tpu.concatenate %28, %0, %31 in 1 : vector<32x4xf32>, vector<32x4xf32>, vector<32x4xf32> -> vector<32x12xf32>
    %c0_6 = arith.constant 0 : index
    %c0_7 = arith.constant 0 : index
    %33 = vector.load %arg2[%c0_6, %c0_7] : memref<12x128xf32, #tpu.memory_space<vmem>>, vector<12x128xf32>
    %cst = arith.constant dense<0.000000e+00> : vector<32x128xf32>
    %34 = tpu.matmul %32, %33, %cst {dimension_numbers = #tpu.dot_dimension_numbers<[1], [0], [0], [1], [0, 0, 1, 1], [], []>} : vector<32x12xf32>, vector<12x128xf32>, vector<32x128xf32> -> vector<32x128xf32>
    %c0_8 = arith.constant 0 : index
    %c0_9 = arith.constant 0 : index
    %35 = vector.load %arg3[%c0_8, %c0_9] : memref<1x128xf32, #tpu.memory_space<vmem>>, vector<1x128xf32>
    %36 = vector.broadcast %35 : vector<1x128xf32> to vector<32x128xf32>
    %37 = arith.addf %34, %36 : vector<32x128xf32>
    %cst_10 = arith.constant 0.000000e+00 : f32
    %38 = vector.broadcast %cst_10 : f32 to vector<32x128xf32>
    %39 = arith.maximumf %37, %38 : vector<32x128xf32>
    %c1_i32_11 = arith.constant 1 : i32
    %40 = tpu.dynamic_rotate %39 by %c1_i32_11 dim 0 : vector<32x128xf32>, i32 -> vector<32x128xf32>
    %41 = vector.broadcast %21 : vector<32x1xf32> to vector<32x128xf32>
    %42 = arith.mulf %40, %41 : vector<32x128xf32>
    %c31_i32_12 = arith.constant 31 : i32
    %43 = tpu.dynamic_rotate %39 by %c31_i32_12 dim 0 : vector<32x128xf32>, i32 -> vector<32x128xf32>
    %44 = vector.broadcast %25 : vector<32x1xf32> to vector<32x128xf32>
    %45 = arith.mulf %43, %44 : vector<32x128xf32>
    %46 = tpu.concatenate %42, %39, %45 in 1 : vector<32x128xf32>, vector<32x128xf32>, vector<32x128xf32> -> vector<32x384xf32>
    %c0_13 = arith.constant 0 : index
    %c0_14 = arith.constant 0 : index
    %47 = vector.load %arg4[%c0_13, %c0_14] : memref<384x128xf32, #tpu.memory_space<vmem>>, vector<384x128xf32>
    %cst_15 = arith.constant dense<0.000000e+00> : vector<32x128xf32>
    %48 = tpu.matmul %46, %47, %cst_15 {dimension_numbers = #tpu.dot_dimension_numbers<[1], [0], [0], [1], [0, 0, 1, 1], [], []>} : vector<32x384xf32>, vector<384x128xf32>, vector<32x128xf32> -> vector<32x128xf32>
    %c0_16 = arith.constant 0 : index
    %c0_17 = arith.constant 0 : index
    %49 = vector.load %arg5[%c0_16, %c0_17] : memref<1x128xf32, #tpu.memory_space<vmem>>, vector<1x128xf32>
    %50 = vector.broadcast %49 : vector<1x128xf32> to vector<32x128xf32>
    %51 = arith.addf %48, %50 : vector<32x128xf32>
    %c0_18 = arith.constant 0 : index
    %c0_19 = arith.constant 0 : index
    %52 = vector.load %arg6[%c0_18, %c0_19] : memref<32x128xf32, #tpu.memory_space<vmem>>, vector<32x128xf32>
    tpu.vector_store %arg6[%c0_18, %c0_19], %51 {strides = array<i32>} : memref<32x128xf32, #tpu.memory_space<vmem>>, vector<32x128xf32>,
    return
  }
  func.func @transform_0(%arg0: i32) -> (i32, i32) {
    %c0_i32 = arith.constant 0 : i32
    %c0_i32_0 = arith.constant 0 : i32
    return %arg0, %c0_i32 : i32, i32
  }
  func.func @transform_1(%arg0: i32) -> (i32, i32) {
    %c0_i32 = arith.constant 0 : i32
    %c0_i32_0 = arith.constant 0 : i32
    %c0_i32_1 = arith.constant 0 : i32
    return %c0_i32, %c0_i32_0 : i32, i32
  }
  func.func @transform_2(%arg0: i32) -> (i32, i32) {
    %c0_i32 = arith.constant 0 : i32
    %c0_i32_0 = arith.constant 0 : i32
    %c0_i32_1 = arith.constant 0 : i32
    return %c0_i32, %c0_i32_0 : i32, i32
  }
  func.func @transform_3(%arg0: i32) -> (i32, i32) {
    %c0_i32 = arith.constant 0 : i32
    %c0_i32_0 = arith.constant 0 : i32
    %c0_i32_1 = arith.constant 0 : i32
    return %c0_i32, %c0_i32_0 : i32, i32
  }
  func.func @transform_4(%arg0: i32) -> (i32, i32) {
    %c0_i32 = arith.constant 0 : i32
    %c0_i32_0 = arith.constant 0 : i32
    %c0_i32_1 = arith.constant 0 : i32
    return %c0_i32, %c0_i32_0 : i32, i32
  }
  func.func @transform_5(%arg0: i32) -> (i32, i32) {
    %c0_i32 = arith.constant 0 : i32
    %c0_i32_0 = arith.constant 0 : i32
    return %arg0, %c0_i32 : i32, i32
  }
}

</mosaic_0001>

<llo_original>
// kernel: ladder_block_pallas.2
$region0: #{ladder_block_pallas.2}
  #allocation0 [shape = 'u32[]', space=smem, size = 0x4, offset = 0x4, fixed_abs, tag = 'smem constant byte address 0x4 - core index']
  #allocation1 [shape = 'u32[144,128]{1,0:T(1,128)}', space=vmem, size = 0x12000, scoped, tag = 'internal scratch']
  %s0 = inlined_call_operand.vmem [shape: f32[64,4], index: 0, kind: input, shape index: {}]
  %s1 = inlined_call_operand.vmem [shape: f32[12,128], index: 1, kind: input, shape index: {}]
  %s2 = inlined_call_operand.vmem [shape: f32[2,128], index: 2, kind: output, shape index: {}]
  %s3 = sld [smem:[#allocation0]]
  $region45: #{ladder_block_pallas.2} parent=0
    _
  %s5 = ssub.s32 1, %s3
  %s6 = scalar_select 0, %s5, %s3
  loop: start=0, step=1, limit=4
  $region2: #{ladder_block_pallas.2} parent=0 // loop_pre_header
    _
  $region3: #{ladder_block_pallas.2} parent=0 // loop_header
    %s8 = sphi 0, %s12
    %p9 = scmp.ge.s32.totalorder %s8, 4
    %s18 = sphi 0, %s20
    %s21 = sphi 0, %s18
    %s22 = sphi 0, %s21
    %s38 = sphi 0, %s22
    %s42 = sphi 0, %s42
    %s44 = sphi 0, %s42
    %s45 = sphi 0, %s44
    %s59 = sphi 0, %s45
    %s63 = sphi 0, %s63
    %s65 = sphi 0, %s63
    %s66 = sphi 0, %s65
    %s80 = sphi 0, %s66
  $region4: #{ladder_block_pallas.2} parent=0 // loop_header_branch
    %11 = sbr.rel (%p9) target = $region8
  $region5: #{ladder_block_pallas.2} parent=0 // loop_body
    %s13 = ssub.s32 %s8, 1
    %s14 = ssub.s32 %s8, 2
    %s15 = sadd.s32 %s8, 1
    %s16 = ssub.s32 %s8, %s15
    %p17 = scmp.eq.s32.totalorder %s16, 0
    %s19 = sadd.s32 %s18, 1
    %s20 = scalar_select %p17, %s18, %s19
    %p23 = pneg %p17
    %p24 = scmp.eq.s32.totalorder %s8, 1
    %p25 = por %p23, %p24
    %p26 = scmp.ne.s32.totalorder %s18, %s21
    %p27 = scmp.eq.s32.totalorder %s8, 0
    %p28 = por %p26, %p27
    %p29 = scmp.ne.s32.totalorder %s18, %s21
    %p30 = scmp.eq.s32.totalorder %s13, 1
    %p31 = por %p29, %p30
    %p32 = scmp.ne.s32.totalorder %s21, %s22
    %p33 = scmp.eq.s32.totalorder %s13, 0
    %p34 = por %p32, %p33
    %p35 = scmp.ne.s32.totalorder %s21, %s22
    %p36 = scmp.eq.s32.totalorder %s14, 1
    %p37 = por %p35, %p36
    %p39 = scmp.ne.s32.totalorder %s22, %s38
    %p40 = scmp.eq.s32.totalorder %s14, 0
    %p41 = por %p39, %p40
    %s43 = sadd.s32 %s42, 1
    %p46 = scmp.eq.s32.totalorder %s8, 1
    %p47 = scmp.ne.s32.totalorder %s42, %s44
    %p48 = scmp.eq.s32.totalorder %s8, 0
    %p49 = por %p47, %p48
    %p50 = scmp.ne.s32.totalorder %s42, %s44
    %p51 = scmp.eq.s32.totalorder %s13, 1
    %p52 = por %p50, %p51
    %p53 = scmp.ne.s32.totalorder %s44, %s45
    %p54 = scmp.eq.s32.totalorder %s13, 0
    %p55 = por %p53, %p54
    %p56 = scmp.ne.s32.totalorder %s44, %s45
    %p57 = scmp.eq.s32.totalorder %s14, 1
    %p58 = por %p56, %p57
    %p60 = scmp.ne.s32.totalorder %s45, %s59
    %p61 = scmp.eq.s32.totalorder %s14, 0
    %p62 = por %p60, %p61
    %s64 = sadd.s32 %s63, 1
    %p67 = scmp.eq.s32.totalorder %s8, 1
    %p68 = scmp.ne.s32.totalorder %s63, %s65
    %p69 = scmp.eq.s32.totalorder %s8, 0
    %p70 = por %p68, %p69
    %p71 = scmp.ne.s32.totalorder %s63, %s65
    %p72 = scmp.eq.s32.totalorder %s13, 1
    %p73 = por %p71, %p72
    %p74 = scmp.ne.s32.totalorder %s65, %s66
    %p75 = scmp.eq.s32.totalorder %s13, 0
    %p76 = por %p74, %p75
    %p77 = scmp.ne.s32.totalorder %s65, %s66
    %p78 = scmp.eq.s32.totalorder %s14, 1
    %p79 = por %p77, %p78
    %p81 = scmp.ne.s32.totalorder %s66, %s80
    %p82 = scmp.eq.s32.totalorder %s14, 0
    %p83 = por %p81, %p82
    %p84 = scmp.le.s32.totalorder 1, %s8
    %p85 = scmp.lt.s32.totalorder %s8, 3
    %p86 = pnand %p84, %p85
    %p87 = pneg %p86
    // Predicated region
    $region9: #{ladder_block_pallas.2} parent=5 // pred_check
      _
    $region10: #{ladder_block_pallas.2} parent=5 // pred_check_branch
      %89 = sbr.rel (%p86) target = $region12
    $region11: #{ladder_block_pallas.2} parent=5 // pred_region
      %s90 = ssub.s32 %s8, 1
      // Predicated region
      $region13: #{ladder_block_pallas.2} parent=11 // pred_check
        %p91 = pneg %p55
      $region14: #{ladder_block_pallas.2} parent=11 // pred_check_branch
        %93 = sbr.rel (%p91) target = $region16
      $region15: #{ladder_block_pallas.2} parent=11 // pred_region
        _
      $region16: #{ladder_block_pallas.2} parent=11 // pred_fallthru
        _
    $region12: #{ladder_block_pallas.2} parent=5 // pred_fallthru
      _
    %p94 = scmp.lt.s32.totalorder %s8, 2
    // Predicated region
    $region17: #{ladder_block_pallas.2} parent=5 // pred_check
      %p95 = pneg %p94
    $region18: #{ladder_block_pallas.2} parent=5 // pred_check_branch
      %97 = sbr.rel (%p95) target = $region20
    $region19: #{ladder_block_pallas.2} parent=5 // pred_region
      // Predicated region
      $region21: #{ladder_block_pallas.2} parent=19 // pred_check
        %p98 = pneg %p28
      $region22: #{ladder_block_pallas.2} parent=19 // pred_check_branch
        %100 = sbr.rel (%p98) target = $region24
      $region23: #{ladder_block_pallas.2} parent=19 // pred_region
        %s101 = smul.u32 4, %s8
        %p102 = scmp.lt.s32.totalorder %s101, 7
        %s103 = scalar_select %p102, %s101, 7
        %s104 = smul.addr %s103, 8
        %s105 = scalar_lea.vmem %s0, %s104
        %s106 = smul.u32 4, %s8
      $region24: #{ladder_block_pallas.2} parent=19 // pred_fallthru
        _
    $region20: #{ladder_block_pallas.2} parent=5 // pred_fallthru
      _
    %p107 = scmp.le.s32.totalorder 1, %s8
    %p108 = scmp.lt.s32.totalorder %s8, 3
    %p109 = pnand %p107, %p108
    %p110 = pneg %p109
    // Predicated region
    $region25: #{ladder_block_pallas.2} parent=5 // pred_check
      _
    $region26: #{ladder_block_pallas.2} parent=5 // pred_check_branch
      %112 = sbr.rel (%p109) target = $region28
    $region27: #{ladder_block_pallas.2} parent=5 // pred_region
      %s113 = ssub.s32 %s8, 1
      %s114 = smul.u32 4, %s13
      %p115 = scmp.lt.s32.totalorder %s114, 7
      %s116 = scalar_select %p115, %s114, 7
      %s117 = smul.addr %s116, 8
      %s118 = scalar_lea.vmem %s0, %s117
      %p119 = pneg %p34
      %p120 = pneg %p31
      %p121 = pneg %p55
      %p122 = pneg %p52
      %p123 = pneg %p76
      %p124 = pneg %p73
      %s125 = smul.u32 4, %s13
      %p126 = scmp.lt.s32.totalorder %s125, 7
      %s127 = scalar_select %p126, %s125, 7
      %s128 = smul.addr %s127, 8
      %s129 = scalar_lea.vmem %s0, %s128
      %s130 = smul.u32 4, %s13
      %v131 = vld [vmem:[%s129] sm:$0xff]
      %v132 = vld [vmem:[%s129 + $0x8] sm:$0xff]
      %v133 = vld [vmem:[%s129 + $0x10] sm:$0xff]
      %v134 = vld [vmem:[%s129 + $0x18] sm:$0xff]
      %v135 = vlaneseq
      %v136 = vshrl.u32 %v135, 7
      %v137 = vadd.s32 %v136, 8
      %v138 = vadd.s32 %v136, 16
      %v139 = vadd.s32 %v136, 24
      %vm140 = vcmp.lt.s32.totalorder %v136, 0
      %v141 = vsub.s32 0, %v136
      %v142 = vsel %vm140, %v141, %v136
      %v143 = vshrl.u32 %v142, 4
      %v144 = vand.u32 %v142, 15
      %v145 = vsub.s32 0, %v144
      %v146 = vsel %vm140, %v145, %v144
      %vm147 = vcmp.lt.s32.totalorder %v137, 0
      %v148 = vsub.s32 0, %v137
      %v149 = vsel %vm147, %v148, %v137
      %v150 = vshrl.u32 %v149, 4
      %v151 = vand.u32 %v149, 15
      %v152 = vsub.s32 0, %v151
      %v153 = vsel %vm147, %v152, %v151
      %vm154 = vcmp.lt.s32.totalorder %v138, 0
      %v155 = vsub.s32 0, %v138
      %v156 = vsel %vm154, %v155, %v138
      %v157 = vshrl.u32 %v156, 4
      %v158 = vand.u32 %v156, 15
      %v159 = vsub.s32 0, %v158
      %v160 = vsel %vm154, %v159, %v158
      %vm161 = vcmp.lt.s32.totalorder %v139, 0
      %v162 = vsub.s32 0, %v139
      %v163 = vsel %vm161, %v162, %v139
      %v164 = vshrl.u32 %v163, 4
      %v165 = vand.u32 %v163, 15
      %v166 = vsub.s32 0, %v165
      %v167 = vsel %vm161, %v166, %v165
      %vm168 = vcmp.ne.s32.totalorder %v146, 0
      %vm169 = vcmp.ne.s32.totalorder %v153, 0
      %vm170 = vcmp.ne.s32.totalorder %v160, 0
      %vm171 = vcmp.ne.s32.totalorder %v167, 0
      %vm172 = vcmp.lt.s32.totalorder %v146, 0
      %vm173 = vcmp.lt.s32.totalorder %v153, 0
      %vm174 = vcmp.lt.s32.totalorder %v160, 0
      %vm175 = vcmp.lt.s32.totalorder %v167, 0
      %vm176 = vmand %vm172, %vm168
      %vm177 = vmand %vm173, %vm169
      %vm178 = vmand %vm174, %vm170
      %vm179 = vmand %vm175, %vm171
      %v180 = vadd.s32 %v146, 16
      %v181 = vadd.s32 %v153, 16
      %v182 = vadd.s32 %v160, 16
      %v183 = vadd.s32 %v167, 16
      %v184 = vsel %vm176, %v180, %v146
      %v185 = vsel %vm177, %v181, %v153
      %v186 = vsel %vm178, %v182, %v160
      %v187 = vsel %vm179, %v183, %v167
      %vm188 = vcmp.ne.s32.totalorder %v184, 0
      %vm189 = vcmp.ne.s32.totalorder %v185, 0
      %vm190 = vcmp.ne.s32.totalorder %v186, 0
      %vm191 = vcmp.ne.s32.totalorder %v187, 0
      %v192 = vsel %vm188, 1, 0
      %v193 = vsel %vm189, 1, 0
      %v194 = vsel %vm190, 1, 0
      %v195 = vsel %vm191, 1, 0
      %v196 = vcvt.s32.f32 %v192
      %v197 = vcvt.s32.f32 %v193
      %v198 = vcvt.s32.f32 %v194
      %v199 = vcvt.s32.f32 %v195
      %vm200 = vcmp.ne.s32.totalorder %v184, 15
      %vm201 = vcmp.ne.s32.totalorder %v185, 15
      %vm202 = vcmp.ne.s32.totalorder %v186, 15
      %vm203 = vcmp.ne.s32.totalorder %v187, 15
      %v204 = vsel %vm200, 1, 0
      %v205 = vsel %vm201, 1, 0
      %v206 = vsel %vm202, 1, 0
      %v207 = vsel %vm203, 1, 0
      %v208 = vcvt.s32.f32 %v204
      %v209 = vcvt.s32.f32 %v205
      %v210 = vcvt.s32.f32 %v206
      %v211 = vcvt.s32.f32 %v207
      %v212 = vrot.slane %v131, 7
      %v213 = vrot.slane %v132, 7
      %v214 = vrot.slane %v133, 7
      %v215 = vrot.slane %v134, 7
      %vm216 = vcmp.lt.s32.totalorder %v136, 1
      %v217 = vsel %vm216, %v214, %v215
      %v218 = vsel %vm216, %v213, %v214
      %v219 = vsel %vm216, %v212, %v213
      %v220 = vsel %vm216, %v215, %v212
      %v221 = vmul.f32 %v220, %v196
      %v222 = vmul.f32 %v219, %v197
      %v223 = vmul.f32 %v218, %v198
      %v224 = vmul.f32 %v217, %v199
      %v225 = vrot.slane %v131, 1
      %v226 = vrot.slane %v132, 1
      %v227 = vrot.slane %v133, 1
      %v228 = vrot.slane %v134, 1
      %vm229 = vcmp.lt.s32.totalorder %v136, 7
      %v230 = vsel %vm229, %v227, %v228
      %v231 = vsel %vm229, %v226, %v227
      %v232 = vsel %vm229, %v225, %v226
      %v233 = vsel %vm229, %v228, %v225
      %v234 = vmul.f32 %v232, %v208
      %v235 = vmul.f32 %v231, %v209
      %v236 = vmul.f32 %v230, %v210
      %v237 = vmul.f32 %v233, %v211
      %242 = vrot.lane.b32.xlu0 %v131, 4
      %v243 = vpop.permute.xlu0 %242
      %244 = vrot.lane.b32.xlu0 %v132, 4
      %v245 = vpop.permute.xlu0 %244
      %246 = vrot.lane.b32.xlu0 %v133, 4
      %v247 = vpop.permute.xlu0 %246
      %248 = vrot.lane.b32.xlu0 %v134, 4
      %v249 = vpop.permute.xlu0 %248
      %258 = vrot.lane.b32.xlu0 %v234, 8
      %v259 = vpop.permute.xlu0 %258
      %260 = vrot.lane.b32.xlu0 %v235, 8
      %v261 = vpop.permute.xlu0 %260
      %262 = vrot.lane.b32.xlu0 %v236, 8
      %v263 = vpop.permute.xlu0 %262
      %264 = vrot.lane.b32.xlu0 %v237, 8
      %v265 = vpop.permute.xlu0 %264
      %vm270 = vcmask 31744
      %v271 = vsel %vm270, %v221, %v243
      %v272 = vsel %vm270, %v222, %v245
      %v273 = vsel %vm270, %v223, %v247
      %v274 = vsel %vm270, %v224, %v249
      %vm275 = vcmask 64512
      %v276 = vsel %vm275, %v271, %v259
      %v277 = vsel %vm275, %v272, %v261
      %v278 = vsel %vm275, %v273, %v263
      %v279 = vsel %vm275, %v274, %v265
      %v280 = vld [vmem:[%s1] sm:$0xff]
      %v281 = vld [vmem:[%s1 + $0x8] sm:$0xf]
      %vm282 = vcmask 97280
      %v284 = vsel %vm282, %v276, 0
      %v287 = vsel %vm282, %v277, 0
      %v290 = vsel %vm282, %v278, 0
      %v293 = vsel %vm282, %v279, 0
      %vm295 = vcmask 1043456
      %v297 = vsel %vm295, %v281, 0
      %299 = vmatprep.subr.mxu0 0.0
      %300 = vmatpush1.msra.mxu0 0.0
      %301 = vmatprep.subr.mxu0 0.0
      %302 = vmatpush1.msra.mxu0 0.0
      %303 = vmatprep.subr.mxu0 0.0
      %304 = vmatpush1.msra.mxu0 0.0
      %305 = vmatprep.subr.mxu0 0.0
      %306 = vmatpush1.msra.mxu0 0.0
      %307 = vmatprep.subr.mxu0 0.0
      %308 = vmatpush1.msra.mxu0 0.0
      %309 = vmatprep.subr.mxu0 0.0
      %310 = vmatpush1.msra.mxu0 0.0
      %311 = vmatprep.subr.mxu0 0.0
      %312 = vmatpush1.msra.mxu0 0.0
      %313 = vmatprep.subr.mxu0 0.0
      %314 = vmatpush1.msra.mxu0 0.0
      %315 = vmatprep.subr.mxu0 0.0
      %316 = vmatpush1.msra.mxu0 0.0
      %317 = vmatprep.subr.mxu0 0.0
      %318 = vmatpush1.msra.mxu0 0.0
      %319 = vmatprep.subr.mxu0 0.0
      %320 = vmatpush1.msra.mxu0 0.0
      %321 = vmatprep.subr.mxu0 0.0
      %322 = vmatpush1.msra.mxu0 0.0
      %323 = vmatprep.subr.mxu0 0.0
      %324 = vmatpush1.msra.mxu0 0.0
      %325 = vmatprep.subr.mxu0 0.0
      %326 = vmatpush1.msra.mxu0 0.0
      %327 = vmatprep.subr.mxu0 0.0
      %328 = vmatpush1.msra.mxu0 %v297
      %329 = vmatprep.subr.mxu0 0.0
      %330 = vmatpush1.msra.mxu0 %v280
      %331 = vmatprep.subr.mxu0 0.0
      %332 = vmatpush2.msra.mxu0 0.0
      %333 = vmatprep.subr.mxu0 0.0
      %334 = vmatpush2.msra.mxu0 0.0
      %335 = vmatprep.subr.mxu0 0.0
      %336 = vmatpush2.msra.mxu0 0.0
      %337 = vmatprep.subr.mxu0 0.0
      %338 = vmatpush2.msra.mxu0 0.0
      %339 = vmatprep.subr.mxu0 0.0
      %340 = vmatpush2.msra.mxu0 0.0
      %341 = vmatprep.subr.mxu0 0.0
      %342 = vmatpush2.msra.mxu0 0.0
      %343 = vmatprep.subr.mxu0 0.0
      %344 = vmatpush2.msra.mxu0 0.0
      %345 = vmatprep.subr.mxu0 0.0
      %346 = vmatpush2.msra.mxu0 0.0
      %347 = vmatprep.subr.mxu0 0.0
      %348 = vmatpush2.msra.mxu0 0.0
      %349 = vmatprep.subr.mxu0 0.0
      %350 = vmatpush2.msra.mxu0 0.0
      %351 = vmatprep.subr.mxu0 0.0
      %352 = vmatpush2.msra.mxu0 0.0
      %353 = vmatprep.subr.mxu0 0.0
      %354 = vmatpush2.msra.mxu0 0.0
      %355 = vmatprep.subr.mxu0 0.0
      %356 = vmatpush2.msra.mxu0 0.0
      %357 = vmatprep.subr.mxu0 0.0
      %358 = vmatpush2.msra.mxu0 0.0
      %359 = vmatprep.subr.mxu0 0.0
      %360 = vmatpush2.msra.mxu0 0.0
      %361 = vmatprep.subr.mxu0 0.0
      %362 = vmatpush2.msra.mxu0 0.0
      %363 = vmatprep.mubr.f32.mxu0 0.0
      %364 = vmatmul.mubr.f32.gmra.mxu0 %v284
      %v365 = vpop.f32.mrf.mxu0
      %v366 = vadd.f32 0.0, %v365
      %v367 = vpop.f32.mrf.mxu0
      %368 = vmatprep.mubr.f32.mxu0 0.0
      %369 = vmatmul.mubr.f32.gmra.mxu0 %v287
      %v370 = vpop.f32.mrf.mxu0
      %v371 = vadd.f32 0.0, %v370
      %v372 = vpop.f32.mrf.mxu0
      %373 = vmatprep.mubr.f32.mxu0 0.0
      %374 = vmatmul.mubr.f32.gmra.mxu0 %v290
      %v375 = vpop.f32.mrf.mxu0
      %v376 = vadd.f32 0.0, %v375
      %v377 = vpop.f32.mrf.mxu0
      %378 = vmatprep.mubr.f32.mxu0 0.0
      %379 = vmatmul.mubr.f32.gmra.mxu0 %v293
      %v380 = vpop.f32.mrf.mxu0
      %v381 = vadd.f32 0.0, %v380
      %v382 = vpop.f32.mrf.mxu0
      %383 = vdwg.mxu0
      %v384 = vadd.f32 %v366, %v371
      %v385 = vadd.f32 %v384, %v376
      %v386 = vadd.f32 %v385, %v381
      %v387 = vrot.slane %v386, 4
      %v388 = vadd.f32 %v386, %v387
      %v389 = vrot.slane %v388, 2
      %v390 = vadd.f32 %v388, %v389
      %v391 = vrot.slane %v390, 1
      %v392 = vadd.f32 %v390, %v391
      %v393 = vmul.f32 %v366, %v366
      %v394 = vmul.f32 %v371, %v371
      %v395 = vmul.f32 %v376, %v376
      %v396 = vmul.f32 %v381, %v381
      %v397 = vadd.f32 %v393, %v394
      %v398 = vadd.f32 %v397, %v395
      %v399 = vadd.f32 %v398, %v396
      %v400 = vrot.slane %v399, 4
      %v401 = vadd.f32 %v399, %v400
      %v402 = vrot.slane %v401, 2
      %v403 = vadd.f32 %v401, %v402
      %v404 = vrot.slane %v403, 1
      %v405 = vadd.f32 %v403, %v404
      %vm406 = vcmask 1040384
      %v407 = vsel %vm406, %v392, %v405
      %p408 = scmp.eq.s32.totalorder %s13, 0
      // Predicated region
      $region29: #{ladder_block_pallas.2} parent=27 // pred_check
        %p409 = pneg %p408
      $region30: #{ladder_block_pallas.2} parent=27 // pred_check_branch
        %411 = sbr.rel (%p409) target = $region32
      $region31: #{ladder_block_pallas.2} parent=27 // pred_region
        %412 = vst [vmem:[%s2] sm:$0x3] 0.0
      $region32: #{ladder_block_pallas.2} parent=27 // pred_fallthru
        _
      %v413 = vld [vmem:[%s2] sm:$0x3]
      %v414 = vadd.f32 %v413, %v407
      %415 = vst [vmem:[%s2] sm:$0x3] %v414
      // Predicated region
      $region33: #{ladder_block_pallas.2} parent=27 // pred_check
        %p416 = pneg %p73
      $region34: #{ladder_block_pallas.2} parent=27 // pred_check_branch
        %418 = sbr.rel (%p416) target = $region36
      $region35: #{ladder_block_pallas.2} parent=27 // pred_region
        _
      $region36: #{ladder_block_pallas.2} parent=27 // pred_fallthru
        _
      // Predicated region
      $region37: #{ladder_block_pallas.2} parent=27 // pred_check
        %p419 = pneg %p73
      $region38: #{ladder_block_pallas.2} parent=27 // pred_check_branch
        %421 = sbr.rel (%p419) target = $region40
      $region39: #{ladder_block_pallas.2} parent=27 // pred_region
        _
      $region40: #{ladder_block_pallas.2} parent=27 // pred_fallthru
        _
    $region28: #{ladder_block_pallas.2} parent=5 // pred_fallthru
      _
    %p422 = scmp.le.s32.totalorder 2, %s8
    // Predicated region
    $region41: #{ladder_block_pallas.2} parent=5 // pred_check
      %p423 = pneg %p422
    $region42: #{ladder_block_pallas.2} parent=5 // pred_check_branch
      %425 = sbr.rel (%p423) target = $region44
    $region43: #{ladder_block_pallas.2} parent=5 // pred_region
      %s426 = ssub.s32 %s8, 2
    $region44: #{ladder_block_pallas.2} parent=5 // pred_fallthru
      _
  $region6: #{ladder_block_pallas.2} parent=0 // loop_footer
    %s12 = sadd.s32 1, %s8
  $region7: #{ladder_block_pallas.2} parent=0 // loop_footer_branch
    %7 = sbr.rel target = $region3
  $region8: #{ladder_block_pallas.2} parent=0 // loop_exit
    _

// kernel: ladder_block_pallas.3
$region0: #{ladder_block_pallas.3}
  #allocation0 [shape = 'u32[]', space=smem, size = 0x4, offset = 0x4, fixed_abs, tag = 'smem constant byte address 0x4 - core index']
  #allocation1 [shape = 'u32[144,128]{1,0:T(1,128)}', space=vmem, size = 0x12000, scoped, tag = 'internal scratch']
  %s0 = inlined_call_operand.vmem [shape: f32[64,4], index: 0, kind: input, shape index: {}]
  %s1 = inlined_call_operand.vmem [shape: f32[12,128], index: 1, kind: input, shape index: {}]
  %s2 = inlined_call_operand.vmem [shape: f32[1,128], index: 2, kind: input, shape index: {}]
  %s3 = inlined_call_operand.vmem [shape: f32[384,128], index: 3, kind: input, shape index: {}]
  %s4 = inlined_call_operand.vmem [shape: f32[1,128], index: 4, kind: input, shape index: {}]
  %s5 = inlined_call_operand.vmem [shape: f32[64,128], index: 5, kind: output, shape index: {}]
  %s6 = sld [smem:[#allocation0]]
  $region53: #{ladder_block_pallas.3} parent=0
    _
  %s8 = ssub.s32 1, %s6
  %s9 = scalar_select 0, %s8, %s6
  loop: start=0, step=1, limit=4
  $region2: #{ladder_block_pallas.3} parent=0 // loop_pre_header
    _
  $region3: #{ladder_block_pallas.3} parent=0 // loop_header
    %s11 = sphi 0, %s15
    %p12 = scmp.ge.s32.totalorder %s11, 4
    %s21 = sphi 0, %s23
    %s24 = sphi 0, %s21
    %s25 = sphi 0, %s24
    %s41 = sphi 0, %s25
    %s45 = sphi 0, %s45
    %s47 = sphi 0, %s45
    %s48 = sphi 0, %s47
    %s62 = sphi 0, %s48
    %s66 = sphi 0, %s66
    %s68 = sphi 0, %s66
    %s69 = sphi 0, %s68
    %s83 = sphi 0, %s69
    %s87 = sphi 0, %s87
    %s89 = sphi 0, %s87
    %s90 = sphi 0, %s89
    %s104 = sphi 0, %s90
    %s108 = sphi 0, %s108
    %s110 = sphi 0, %s108
    %s111 = sphi 0, %s110
    %s125 = sphi 0, %s111
    %s131 = sphi 0, %s133
    %s134 = sphi 0, %s131
    %s135 = sphi 0, %s134
    %s151 = sphi 0, %s135
  $region4: #{ladder_block_pallas.3} parent=0 // loop_header_branch
    %14 = sbr.rel (%p12) target = $region8
  $region5: #{ladder_block_pallas.3} parent=0 // loop_body
    %s16 = ssub.s32 %s11, 1
    %s17 = ssub.s32 %s11, 2
    %s18 = sadd.s32 %s11, 1
    %s19 = ssub.s32 %s11, %s18
    %p20 = scmp.eq.s32.totalorder %s19, 0
    %s22 = sadd.s32 %s21, 1
    %s23 = scalar_select %p20, %s21, %s22
    %p26 = pneg %p20
    %p27 = scmp.eq.s32.totalorder %s11, 1
    %p28 = por %p26, %p27
    %p29 = scmp.ne.s32.totalorder %s21, %s24
    %p30 = scmp.eq.s32.totalorder %s11, 0
    %p31 = por %p29, %p30
    %p32 = scmp.ne.s32.totalorder %s21, %s24
    %p33 = scmp.eq.s32.totalorder %s16, 1
    %p34 = por %p32, %p33
    %p35 = scmp.ne.s32.totalorder %s24, %s25
    %p36 = scmp.eq.s32.totalorder %s16, 0
    %p37 = por %p35, %p36
    %p38 = scmp.ne.s32.totalorder %s24, %s25
    %p39 = scmp.eq.s32.totalorder %s17, 1
    %p40 = por %p38, %p39
    %p42 = scmp.ne.s32.totalorder %s25, %s41
    %p43 = scmp.eq.s32.totalorder %s17, 0
    %p44 = por %p42, %p43
    %s46 = sadd.s32 %s45, 1
    %p49 = scmp.eq.s32.totalorder %s11, 1
    %p50 = scmp.ne.s32.totalorder %s45, %s47
    %p51 = scmp.eq.s32.totalorder %s11, 0
    %p52 = por %p50, %p51
    %p53 = scmp.ne.s32.totalorder %s45, %s47
    %p54 = scmp.eq.s32.totalorder %s16, 1
    %p55 = por %p53, %p54
    %p56 = scmp.ne.s32.totalorder %s47, %s48
    %p57 = scmp.eq.s32.totalorder %s16, 0
    %p58 = por %p56, %p57
    %p59 = scmp.ne.s32.totalorder %s47, %s48
    %p60 = scmp.eq.s32.totalorder %s17, 1
    %p61 = por %p59, %p60
    %p63 = scmp.ne.s32.totalorder %s48, %s62
    %p64 = scmp.eq.s32.totalorder %s17, 0
    %p65 = por %p63, %p64
    %s67 = sadd.s32 %s66, 1
    %p70 = scmp.eq.s32.totalorder %s11, 1
    %p71 = scmp.ne.s32.totalorder %s66, %s68
    %p72 = scmp.eq.s32.totalorder %s11, 0
    %p73 = por %p71, %p72
    %p74 = scmp.ne.s32.totalorder %s66, %s68
    %p75 = scmp.eq.s32.totalorder %s16, 1
    %p76 = por %p74, %p75
    %p77 = scmp.ne.s32.totalorder %s68, %s69
    %p78 = scmp.eq.s32.totalorder %s16, 0
    %p79 = por %p77, %p78
    %p80 = scmp.ne.s32.totalorder %s68, %s69
    %p81 = scmp.eq.s32.totalorder %s17, 1
    %p82 = por %p80, %p81
    %p84 = scmp.ne.s32.totalorder %s69, %s83
    %p85 = scmp.eq.s32.totalorder %s17, 0
    %p86 = por %p84, %p85
    %s88 = sadd.s32 %s87, 1
    %p91 = scmp.eq.s32.totalorder %s11, 1
    %p92 = scmp.ne.s32.totalorder %s87, %s89
    %p93 = scmp.eq.s32.totalorder %s11, 0
    %p94 = por %p92, %p93
    %p95 = scmp.ne.s32.totalorder %s87, %s89
    %p96 = scmp.eq.s32.totalorder %s16, 1
    %p97 = por %p95, %p96
    %p98 = scmp.ne.s32.totalorder %s89, %s90
    %p99 = scmp.eq.s32.totalorder %s16, 0
    %p100 = por %p98, %p99
    %p101 = scmp.ne.s32.totalorder %s89, %s90
    %p102 = scmp.eq.s32.totalorder %s17, 1
    %p103 = por %p101, %p102
    %p105 = scmp.ne.s32.totalorder %s90, %s104
    %p106 = scmp.eq.s32.totalorder %s17, 0
    %p107 = por %p105, %p106
    %s109 = sadd.s32 %s108, 1
    %p112 = scmp.eq.s32.totalorder %s11, 1
    %p113 = scmp.ne.s32.totalorder %s108, %s110
    %p114 = scmp.eq.s32.totalorder %s11, 0
    %p115 = por %p113, %p114
    %p116 = scmp.ne.s32.totalorder %s108, %s110
    %p117 = scmp.eq.s32.totalorder %s16, 1
    %p118 = por %p116, %p117
    %p119 = scmp.ne.s32.totalorder %s110, %s111
    %p120 = scmp.eq.s32.totalorder %s16, 0
    %p121 = por %p119, %p120
    %p122 = scmp.ne.s32.totalorder %s110, %s111
    %p123 = scmp.eq.s32.totalorder %s17, 1
    %p124 = por %p122, %p123
    %p126 = scmp.ne.s32.totalorder %s111, %s125
    %p127 = scmp.eq.s32.totalorder %s17, 0
    %p128 = por %p126, %p127
    %s129 = ssub.s32 %s11, %s18
    %p130 = scmp.eq.s32.totalorder %s129, 0
    %s132 = sadd.s32 %s131, 1
    %s133 = scalar_select %p130, %s131, %s132
    %p136 = pneg %p130
    %p137 = scmp.eq.s32.totalorder %s11, 1
    %p138 = por %p136, %p137
    %p139 = scmp.ne.s32.totalorder %s131, %s134
    %p140 = scmp.eq.s32.totalorder %s11, 0
    %p141 = por %p139, %p140
    %p142 = scmp.ne.s32.totalorder %s131, %s134
    %p143 = scmp.eq.s32.totalorder %s16, 1
    %p144 = por %p142, %p143
    %p145 = scmp.ne.s32.totalorder %s134, %s135
    %p146 = scmp.eq.s32.totalorder %s16, 0
    %p147 = por %p145, %p146
    %p148 = scmp.ne.s32.totalorder %s134, %s135
    %p149 = scmp.eq.s32.totalorder %s17, 1
    %p150 = por %p148, %p149
    %p152 = scmp.ne.s32.totalorder %s135, %s151
    %p153 = scmp.eq.s32.totalorder %s17, 0
    %p154 = por %p152, %p153
    %p155 = scmp.le.s32.totalorder 1, %s11
    %p156 = scmp.lt.s32.totalorder %s11, 3
    %p157 = pnand %p155, %p156
    %p158 = pneg %p157
    // Predicated region
    $region9: #{ladder_block_pallas.3} parent=5 // pred_check
      _
    $region10: #{ladder_block_pallas.3} parent=5 // pred_check_branch
      %160 = sbr.rel (%p157) target = $region12
    $region11: #{ladder_block_pallas.3} parent=5 // pred_region
      %s161 = ssub.s32 %s11, 1
      // Predicated region
      $region13: #{ladder_block_pallas.3} parent=11 // pred_check
        %p162 = pneg %p58
      $region14: #{ladder_block_pallas.3} parent=11 // pred_check_branch
        %164 = sbr.rel (%p162) target = $region16
      $region15: #{ladder_block_pallas.3} parent=11 // pred_region
        _
      $region16: #{ladder_block_pallas.3} parent=11 // pred_fallthru
        _
      // Predicated region
      $region17: #{ladder_block_pallas.3} parent=11 // pred_check
        %p165 = pneg %p79
      $region18: #{ladder_block_pallas.3} parent=11 // pred_check_branch
        %167 = sbr.rel (%p165) target = $region20
      $region19: #{ladder_block_pallas.3} parent=11 // pred_region
        _
      $region20: #{ladder_block_pallas.3} parent=11 // pred_fallthru
        _
      // Predicated region
      $region21: #{ladder_block_pallas.3} parent=11 // pred_check
        %p168 = pneg %p100
      $region22: #{ladder_block_pallas.3} parent=11 // pred_check_branch
        %170 = sbr.rel (%p168) target = $region24
      $region23: #{ladder_block_pallas.3} parent=11 // pred_region
        _
      $region24: #{ladder_block_pallas.3} parent=11 // pred_fallthru
        _
      // Predicated region
      $region25: #{ladder_block_pallas.3} parent=11 // pred_check
        %p171 = pneg %p121
      $region26: #{ladder_block_pallas.3} parent=11 // pred_check_branch
        %173 = sbr.rel (%p171) target = $region28
      $region27: #{ladder_block_pallas.3} parent=11 // pred_region
        _
      $region28: #{ladder_block_pallas.3} parent=11 // pred_fallthru
        _
    $region12: #{ladder_block_pallas.3} parent=5 // pred_fallthru
      _
    %p174 = scmp.lt.s32.totalorder %s11, 2
    // Predicated region
    $region29: #{ladder_block_pallas.3} parent=5 // pred_check
      %p175 = pneg %p174
    $region30: #{ladder_block_pallas.3} parent=5 // pred_check_branch
      %177 = sbr.rel (%p175) target = $region32
    $region31: #{ladder_block_pallas.3} parent=5 // pred_region
      // Predicated region
      $region33: #{ladder_block_pallas.3} parent=31 // pred_check
        %p178 = pneg %p31
      $region34: #{ladder_block_pallas.3} parent=31 // pred_check_branch
        %180 = sbr.rel (%p178) target = $region36
      $region35: #{ladder_block_pallas.3} parent=31 // pred_region
        %s181 = smul.u32 4, %s11
        %p182 = scmp.lt.s32.totalorder %s181, 7
        %s183 = scalar_select %p182, %s181, 7
        %s184 = smul.addr %s183, 8
        %s185 = scalar_lea.vmem %s0, %s184
        %s186 = smul.u32 4, %s11
      $region36: #{ladder_block_pallas.3} parent=31 // pred_fallthru
        _
    $region32: #{ladder_block_pallas.3} parent=5 // pred_fallthru
      _
    %p187 = scmp.le.s32.totalorder 1, %s11
    %p188 = scmp.lt.s32.totalorder %s11, 3
    %p189 = pnand %p187, %p188
    %p190 = pneg %p189
    // Predicated region
    $region37: #{ladder_block_pallas.3} parent=5 // pred_check
      _
    $region38: #{ladder_block_pallas.3} parent=5 // pred_check_branch
      %192 = sbr.rel (%p189) target = $region40
    $region39: #{ladder_block_pallas.3} parent=5 // pred_region
      %s193 = ssub.s32 %s11, 1
      %s194 = smul.u32 4, %s16
      %p195 = scmp.lt.s32.totalorder %s194, 7
      %s196 = scalar_select %p195, %s194, 7
      %s197 = smul.addr %s196, 8
      %s198 = scalar_lea.vmem %s0, %s197
      %p199 = pneg %p37
      %p200 = pneg %p34
      %p201 = pneg %p58
      %p202 = pneg %p55
      %p203 = pneg %p79
      %p204 = pneg %p76
      %p205 = pneg %p100
      %p206 = pneg %p97
      %p207 = pneg %p121
      %p208 = pneg %p118
      %p209 = pneg %p147
      %p210 = pneg %p144
      %s211 = smul.u32 4, %s16
      %p212 = scmp.lt.s32.totalorder %s211, 7
      %s213 = scalar_select %p212, %s211, 7
      %s214 = smul.addr %s213, 8
      %s215 = scalar_lea.vmem %s5, %s214
      %s216 = smul.u32 4, %s16
      %p217 = scmp.lt.s32.totalorder %s216, 7
      %s218 = scalar_select %p217, %s216, 7
      %s219 = smul.addr %s218, 8
      %s220 = scalar_lea.vmem %s0, %s219
      %s221 = smul.u32 4, %s16
      %s222 = smul.u32 4, %s16
      %p223 = scmp.lt.s32.totalorder %s222, 7
      %s224 = scalar_select %p223, %s222, 7
      %s225 = smul.addr %s224, 8
      %s226 = scalar_lea.vmem %s5, %s225
      %s227 = smul.u32 4, %s16
      %v228 = vld [vmem:[%s220] sm:$0xff]
      %v229 = vld [vmem:[%s220 + $0x8] sm:$0xff]
      %v230 = vld [vmem:[%s220 + $0x10] sm:$0xff]
      %v231 = vld [vmem:[%s220 + $0x18] sm:$0xff]
      %v232 = vlaneseq
      %v233 = vshrl.u32 %v232, 7
      %v234 = vadd.s32 %v233, 8
      %v235 = vadd.s32 %v233, 16
      %v236 = vadd.s32 %v233, 24
      %vm237 = vcmp.lt.s32.totalorder %v233, 0
      %v238 = vsub.s32 0, %v233
      %v239 = vsel %vm237, %v238, %v233
      %v240 = vshrl.u32 %v239, 4
      %v241 = vand.u32 %v239, 15
      %v242 = vsub.s32 0, %v241
      %v243 = vsel %vm237, %v242, %v241
      %vm244 = vcmp.lt.s32.totalorder %v234, 0
      %v245 = vsub.s32 0, %v234
      %v246 = vsel %vm244, %v245, %v234
      %v247 = vshrl.u32 %v246, 4
      %v248 = vand.u32 %v246, 15
      %v249 = vsub.s32 0, %v248
      %v250 = vsel %vm244, %v249, %v248
      %vm251 = vcmp.lt.s32.totalorder %v235, 0
      %v252 = vsub.s32 0, %v235
      %v253 = vsel %vm251, %v252, %v235
      %v254 = vshrl.u32 %v253, 4
      %v255 = vand.u32 %v253, 15
      %v256 = vsub.s32 0, %v255
      %v257 = vsel %vm251, %v256, %v255
      %vm258 = vcmp.lt.s32.totalorder %v236, 0
      %v259 = vsub.s32 0, %v236
      %v260 = vsel %vm258, %v259, %v236
      %v261 = vshrl.u32 %v260, 4
      %v262 = vand.u32 %v260, 15
      %v263 = vsub.s32 0, %v262
      %v264 = vsel %vm258, %v263, %v262
      %vm265 = vcmp.ne.s32.totalorder %v243, 0
      %vm266 = vcmp.ne.s32.totalorder %v250, 0
      %vm267 = vcmp.ne.s32.totalorder %v257, 0
      %vm268 = vcmp.ne.s32.totalorder %v264, 0
      %vm269 = vcmp.lt.s32.totalorder %v243, 0
      %vm270 = vcmp.lt.s32.totalorder %v250, 0
      %vm271 = vcmp.lt.s32.totalorder %v257, 0
      %vm272 = vcmp.lt.s32.totalorder %v264, 0
      %vm273 = vmand %vm269, %vm265
      %vm274 = vmand %vm270, %vm266
      %vm275 = vmand %vm271, %vm267
      %vm276 = vmand %vm272, %vm268
      %v277 = vadd.s32 %v243, 16
      %v278 = vadd.s32 %v250, 16
      %v279 = vadd.s32 %v257, 16
      %v280 = vadd.s32 %v264, 16
      %v281 = vsel %vm273, %v277, %v243
      %v282 = vsel %vm274, %v278, %v250
      %v283 = vsel %vm275, %v279, %v257
      %v284 = vsel %vm276, %v280, %v264
      %vm285 = vcmp.ne.s32.totalorder %v281, 0
      %vm286 = vcmp.ne.s32.totalorder %v282, 0
      %vm287 = vcmp.ne.s32.totalorder %v283, 0
      %vm288 = vcmp.ne.s32.totalorder %v284, 0
      %v289 = vsel %vm285, 1, 0
      %v290 = vsel %vm286, 1, 0
      %v291 = vsel %vm287, 1, 0
      %v292 = vsel %vm288, 1, 0
      %v293 = vcvt.s32.f32 %v289
      %v294 = vcvt.s32.f32 %v290
      %v295 = vcvt.s32.f32 %v291
      %v296 = vcvt.s32.f32 %v292
      %vm297 = vcmp.ne.s32.totalorder %v281, 15
      %vm298 = vcmp.ne.s32.totalorder %v282, 15
      %vm299 = vcmp.ne.s32.totalorder %v283, 15
      %vm300 = vcmp.ne.s32.totalorder %v284, 15
      %v301 = vsel %vm297, 1, 0
      %v302 = vsel %vm298, 1, 0
      %v303 = vsel %vm299, 1, 0
      %v304 = vsel %vm300, 1, 0
      %v305 = vcvt.s32.f32 %v301
      %v306 = vcvt.s32.f32 %v302
      %v307 = vcvt.s32.f32 %v303
      %v308 = vcvt.s32.f32 %v304
      %v309 = vrot.slane %v228, 7
      %v310 = vrot.slane %v229, 7
      %v311 = vrot.slane %v230, 7
      %v312 = vrot.slane %v231, 7
      %vm313 = vcmp.lt.s32.totalorder %v233, 1
      %v314 = vsel %vm313, %v311, %v312
      %v315 = vsel %vm313, %v310, %v311
      %v316 = vsel %vm313, %v309, %v310
      %v317 = vsel %vm313, %v312, %v309
      %v318 = vmul.f32 %v317, %v293
      %v319 = vmul.f32 %v316, %v294
      %v320 = vmul.f32 %v315, %v295
      %v321 = vmul.f32 %v314, %v296
      %v322 = vrot.slane %v228, 1
      %v323 = vrot.slane %v229, 1
      %v324 = vrot.slane %v230, 1
      %v325 = vrot.slane %v231, 1
      %vm326 = vcmp.lt.s32.totalorder %v233, 7
      %v327 = vsel %vm326, %v324, %v325
      %v328 = vsel %vm326, %v323, %v324
      %v329 = vsel %vm326, %v322, %v323
      %v330 = vsel %vm326, %v325, %v322
      %v331 = vmul.f32 %v329, %v305
      %v332 = vmul.f32 %v328, %v306
      %v333 = vmul.f32 %v327, %v307
      %v334 = vmul.f32 %v330, %v308
      %339 = vrot.lane.b32.xlu0 %v228, 4
      %v340 = vpop.permute.xlu0 %339
      %341 = vrot.lane.b32.xlu0 %v229, 4
      %v342 = vpop.permute.xlu0 %341
      %343 = vrot.lane.b32.xlu0 %v230, 4
      %v344 = vpop.permute.xlu0 %343
      %345 = vrot.lane.b32.xlu0 %v231, 4
      %v346 = vpop.permute.xlu0 %345
      %355 = vrot.lane.b32.xlu0 %v331, 8
      %v356 = vpop.permute.xlu0 %355
      %357 = vrot.lane.b32.xlu0 %v332, 8
      %v358 = vpop.permute.xlu0 %357
      %359 = vrot.lane.b32.xlu0 %v333, 8
      %v360 = vpop.permute.xlu0 %359
      %361 = vrot.lane.b32.xlu0 %v334, 8
      %v362 = vpop.permute.xlu0 %361
      %vm367 = vcmask 31744
      %v368 = vsel %vm367, %v318, %v340
      %v369 = vsel %vm367, %v319, %v342
      %v370 = vsel %vm367, %v320, %v344
      %v371 = vsel %vm367, %v321, %v346
      %vm372 = vcmask 64512
      %v373 = vsel %vm372, %v368, %v356
      %v374 = vsel %vm372, %v369, %v358
      %v375 = vsel %vm372, %v370, %v360
      %v376 = vsel %vm372, %v371, %v362
      %v377 = vld [vmem:[%s1] sm:$0xff]
      %v378 = vld [vmem:[%s1 + $0x8] sm:$0xf]
      %v379 = vld [vmem:[%s2] sm:$0x1]
      %v381 = vlaneseq
      %v382 = vshrl.u32 %v381, 7
      %v383 = vsub.s32 0, %v382
      %v384 = vrot.slane %v379, %v383
      %vm386 = vcmask 97280
      %v388 = vsel %vm386, %v373, 0
      %v391 = vsel %vm386, %v374, 0
      %v394 = vsel %vm386, %v375, 0
      %v397 = vsel %vm386, %v376, 0
      %vm399 = vcmask 1043456
      %v401 = vsel %vm399, %v378, 0
      %403 = vmatprep.subr.mxu0 0.0
      %404 = vmatpush1.msra.mxu0 0.0
      %405 = vmatprep.subr.mxu0 0.0
      %406 = vmatpush1.msra.mxu0 0.0
      %407 = vmatprep.subr.mxu0 0.0
      %408 = vmatpush1.msra.mxu0 0.0
      %409 = vmatprep.subr.mxu0 0.0
      %410 = vmatpush1.msra.mxu0 0.0
      %411 = vmatprep.subr.mxu0 0.0
      %412 = vmatpush1.msra.mxu0 0.0
      %413 = vmatprep.subr.mxu0 0.0
      %414 = vmatpush1.msra.mxu0 0.0
      %415 = vmatprep.subr.mxu0 0.0
      %416 = vmatpush1.msra.mxu0 0.0
      %417 = vmatprep.subr.mxu0 0.0
      %418 = vmatpush1.msra.mxu0 0.0
      %419 = vmatprep.subr.mxu0 0.0
      %420 = vmatpush1.msra.mxu0 0.0
      %421 = vmatprep.subr.mxu0 0.0
      %422 = vmatpush1.msra.mxu0 0.0
      %423 = vmatprep.subr.mxu0 0.0
      %424 = vmatpush1.msra.mxu0 0.0
      %425 = vmatprep.subr.mxu0 0.0
      %426 = vmatpush1.msra.mxu0 0.0
      %427 = vmatprep.subr.mxu0 0.0
      %428 = vmatpush1.msra.mxu0 0.0
      %429 = vmatprep.subr.mxu0 0.0
      %430 = vmatpush1.msra.mxu0 0.0
      %431 = vmatprep.subr.mxu0 0.0
      %432 = vmatpush1.msra.mxu0 %v401
      %433 = vmatprep.subr.mxu0 0.0
      %434 = vmatpush1.msra.mxu0 %v377
      %435 = vmatprep.subr.mxu0 0.0
      %436 = vmatpush2.msra.mxu0 0.0
      %437 = vmatprep.subr.mxu0 0.0
      %438 = vmatpush2.msra.mxu0 0.0
      %439 = vmatprep.subr.mxu0 0.0
      %440 = vmatpush2.msra.mxu0 0.0
      %441 = vmatprep.subr.mxu0 0.0
      %442 = vmatpush2.msra.mxu0 0.0
      %443 = vmatprep.subr.mxu0 0.0
      %444 = vmatpush2.msra.mxu0 0.0
      %445 = vmatprep.subr.mxu0 0.0
      %446 = vmatpush2.msra.mxu0 0.0
      %447 = vmatprep.subr.mxu0 0.0
      %448 = vmatpush2.msra.mxu0 0.0
      %449 = vmatprep.subr.mxu0 0.0
      %450 = vmatpush2.msra.mxu0 0.0
      %451 = vmatprep.subr.mxu0 0.0
      %452 = vmatpush2.msra.mxu0 0.0
      %453 = vmatprep.subr.mxu0 0.0
      %454 = vmatpush2.msra.mxu0 0.0
      %455 = vmatprep.subr.mxu0 0.0
      %456 = vmatpush2.msra.mxu0 0.0
      %457 = vmatprep.subr.mxu0 0.0
      %458 = vmatpush2.msra.mxu0 0.0
      %459 = vmatprep.subr.mxu0 0.0
      %460 = vmatpush2.msra.mxu0 0.0
      %461 = vmatprep.subr.mxu0 0.0
      %462 = vmatpush2.msra.mxu0 0.0
      %463 = vmatprep.subr.mxu0 0.0
      %464 = vmatpush2.msra.mxu0 0.0
      %465 = vmatprep.subr.mxu0 0.0
      %466 = vmatpush2.msra.mxu0 0.0
      %467 = vmatprep.mubr.f32.mxu0 0.0
      %468 = vmatmul.mubr.f32.gmra.mxu0 %v388
      %v469 = vpop.f32.mrf.mxu0
      %v470 = vadd.f32 %v384, %v469
      %v471 = vpop.f32.mrf.mxu0
      %472 = vmatprep.mubr.f32.mxu0 0.0
      %473 = vmatmul.mubr.f32.gmra.mxu0 %v391
      %v474 = vpop.f32.mrf.mxu0
      %v475 = vadd.f32 %v384, %v474
      %v476 = vpop.f32.mrf.mxu0
      %477 = vmatprep.mubr.f32.mxu0 0.0
      %478 = vmatmul.mubr.f32.gmra.mxu0 %v394
      %v479 = vpop.f32.mrf.mxu0
      %v480 = vadd.f32 %v384, %v479
      %v481 = vpop.f32.mrf.mxu0
      %482 = vmatprep.mubr.f32.mxu0 0.0
      %483 = vmatmul.mubr.f32.gmra.mxu0 %v397
      %v484 = vpop.f32.mrf.mxu0
      %v485 = vadd.f32 %v384, %v484
      %v486 = vpop.f32.mrf.mxu0
      %487 = vdwg.mxu0
      %v488 = vmax.f32 %v470, 0.0
      %v489 = vmax.f32 %v475, 0.0
      %v490 = vmax.f32 %v480, 0.0
      %v491 = vmax.f32 %v485, 0.0
      %v492 = vrot.slane %v488, 7
      %v493 = vrot.slane %v489, 7
      %v494 = vrot.slane %v490, 7
      %v495 = vrot.slane %v491, 7
      %v496 = vsel %vm313, %v494, %v495
      %v497 = vsel %vm313, %v493, %v494
      %v498 = vsel %vm313, %v492, %v493
      %v499 = vsel %vm313, %v495, %v492
      %v500 = vmul.f32 %v499, %v293
      %v501 = vmul.f32 %v498, %v294
      %v502 = vmul.f32 %v497, %v295
      %v503 = vmul.f32 %v496, %v296
      %v504 = vrot.slane %v488, 1
      %v505 = vrot.slane %v489, 1
      %v506 = vrot.slane %v490, 1
      %v507 = vrot.slane %v491, 1
      %v508 = vsel %vm326, %v506, %v507
      %v509 = vsel %vm326, %v505, %v506
      %v510 = vsel %vm326, %v504, %v505
      %v511 = vsel %vm326, %v507, %v504
      %v512 = vmul.f32 %v510, %v305
      %v513 = vmul.f32 %v509, %v306
      %v514 = vmul.f32 %v508, %v307
      %v515 = vmul.f32 %v511, %v308
      %v516 = vld [vmem:[%s3] sm:$0xff]
      %v517 = vld [vmem:[%s3 + $0x8] sm:$0xff]
      %v518 = vld [vmem:[%s3 + $0x10] sm:$0xff]
      %v519 = vld [vmem:[%s3 + $0x18] sm:$0xff]
      %v520 = vld [vmem:[%s3 + $0x20] sm:$0xff]
      %v521 = vld [vmem:[%s3 + $0x28] sm:$0xff]
      %v522 = vld [vmem:[%s3 + $0x30] sm:$0xff]
      %v523 = vld [vmem:[%s3 + $0x38] sm:$0xff]
      %v524 = vld [vmem:[%s3 + $0x40] sm:$0xff]
      %v525 = vld [vmem:[%s3 + $0x48] sm:$0xff]
      %v526 = vld [vmem:[%s3 + $0x50] sm:$0xff]
      %v527 = vld [vmem:[%s3 + $0x58] sm:$0xff]
      %v528 = vld [vmem:[%s3 + $0x60] sm:$0xff]
      %v529 = vld [vmem:[%s3 + $0x68] sm:$0xff]
      %v530 = vld [vmem:[%s3 + $0x70] sm:$0xff]
      %v531 = vld [vmem:[%s3 + $0x78] sm:$0xff]
      %v532 = vld [vmem:[%s3 + $0x80] sm:$0xff]
      %v533 = vld [vmem:[%s3 + $0x88] sm:$0xff]
      %v534 = vld [vmem:[%s3 + $0x90] sm:$0xff]
      %v535 = vld [vmem:[%s3 + $0x98] sm:$0xff]
      %v536 = vld [vmem:[%s3 + $0xa0] sm:$0xff]
      %v537 = vld [vmem:[%s3 + $0xa8] sm:$0xff]
      %v538 = vld [vmem:[%s3 + $0xb0] sm:$0xff]
      %v539 = vld [vmem:[%s3 + $0xb8] sm:$0xff]
      %v540 = vld [vmem:[%s3 + $0xc0] sm:$0xff]
      %v541 = vld [vmem:[%s3 + $0xc8] sm:$0xff]
      %v542 = vld [vmem:[%s3 + $0xd0] sm:$0xff]
      %v543 = vld [vmem:[%s3 + $0xd8] sm:$0xff]
      %v544 = vld [vmem:[%s3 + $0xe0] sm:$0xff]
      %v545 = vld [vmem:[%s3 + $0xe8] sm:$0xff]
      %v546 = vld [vmem:[%s3 + $0xf0] sm:$0xff]
      %v547 = vld [vmem:[%s3 + $0xf8] sm:$0xff]
      %v548 = vld [vmem:[%s3 + $0x100] sm:$0xff]
      %v549 = vld [vmem:[%s3 + $0x108] sm:$0xff]
      %v550 = vld [vmem:[%s3 + $0x110] sm:$0xff]
      %v551 = vld [vmem:[%s3 + $0x118] sm:$0xff]
      %v552 = vld [vmem:[%s3 + $0x120] sm:$0xff]
      %v553 = vld [vmem:[%s3 + $0x128] sm:$0xff]
      %v554 = vld [vmem:[%s3 + $0x130] sm:$0xff]
      %v555 = vld [vmem:[%s3 + $0x138] sm:$0xff]
      %v556 = vld [vmem:[%s3 + $0x140] sm:$0xff]
      %v557 = vld [vmem:[%s3 + $0x148] sm:$0xff]
      %v558 = vld [vmem:[%s3 + $0x150] sm:$0xff]
      %v559 = vld [vmem:[%s3 + $0x158] sm:$0xff]
      %v560 = vld [vmem:[%s3 + $0x160] sm:$0xff]
      %v561 = vld [vmem:[%s3 + $0x168] sm:$0xff]
      %v562 = vld [vmem:[%s3 + $0x170] sm:$0xff]
      %v563 = vld [vmem:[%s3 + $0x178] sm:$0xff]
      %v564 = vld [vmem:[%s4] sm:$0x1]
      %v566 = vlaneseq
      %v567 = vshrl.u32 %v566, 7
      %v568 = vsub.s32 0, %v567
      %v569 = vrot.slane %v564, %v568
      %571 = vmatprep.subr.mxu0 0.0
      %572 = vmatpush1.msra.mxu0 %v531
      %573 = vmatprep.subr.mxu0 0.0
      %574 = vmatpush1.msra.mxu0 %v530
      %575 = vmatprep.subr.mxu0 0.0
      %576 = vmatpush1.msra.mxu0 %v529
      %577 = vmatprep.subr.mxu0 0.0
      %578 = vmatpush1.msra.mxu0 %v528
      %579 = vmatprep.subr.mxu0 0.0
      %580 = vmatpush1.msra.mxu0 %v527
      %581 = vmatprep.subr.mxu0 0.0
      %582 = vmatpush1.msra.mxu0 %v526
      %583 = vmatprep.subr.mxu0 0.0
      %584 = vmatpush1.msra.mxu0 %v525
      %585 = vmatprep.subr.mxu0 0.0
      %586 = vmatpush1.msra.mxu0 %v524
      %587 = vmatprep.subr.mxu0 0.0
      %588 = vmatpush1.msra.mxu0 %v523
      %589 = vmatprep.subr.mxu0 0.0
      %590 = vmatpush1.msra.mxu0 %v522
      %591 = vmatprep.subr.mxu0 0.0
      %592 = vmatpush1.msra.mxu0 %v521
      %593 = vmatprep.subr.mxu0 0.0
      %594 = vmatpush1.msra.mxu0 %v520
      %595 = vmatprep.subr.mxu0 0.0
      %596 = vmatpush1.msra.mxu0 %v519
      %597 = vmatprep.subr.mxu0 0.0
      %598 = vmatpush1.msra.mxu0 %v518
      %599 = vmatprep.subr.mxu0 0.0
      %600 = vmatpush1.msra.mxu0 %v517
      %601 = vmatprep.subr.mxu0 0.0
      %602 = vmatpush1.msra.mxu0 %v516
      %603 = vmatprep.subr.mxu0 0.0
      %604 = vmatpush2.msra.mxu0 %v547
      %605 = vmatprep.subr.mxu0 0.0
      %606 = vmatpush2.msra.mxu0 %v546
      %607 = vmatprep.subr.mxu0 0.0
      %608 = vmatpush2.msra.mxu0 %v545
      %609 = vmatprep.subr.mxu0 0.0
      %610 = vmatpush2.msra.mxu0 %v544
      %611 = vmatprep.subr.mxu0 0.0
      %612 = vmatpush2.msra.mxu0 %v543
      %613 = vmatprep.subr.mxu0 0.0
      %614 = vmatpush2.msra.mxu0 %v542
      %615 = vmatprep.subr.mxu0 0.0
      %616 = vmatpush2.msra.mxu0 %v541
      %617 = vmatprep.subr.mxu0 0.0
      %618 = vmatpush2.msra.mxu0 %v540
      %619 = vmatprep.subr.mxu0 0.0
      %620 = vmatpush2.msra.mxu0 %v539
      %621 = vmatprep.subr.mxu0 0.0
      %622 = vmatpush2.msra.mxu0 %v538
      %623 = vmatprep.subr.mxu0 0.0
      %624 = vmatpush2.msra.mxu0 %v537
      %625 = vmatprep.subr.mxu0 0.0
      %626 = vmatpush2.msra.mxu0 %v536
      %627 = vmatprep.subr.mxu0 0.0
      %628 = vmatpush2.msra.mxu0 %v535
      %629 = vmatprep.subr.mxu0 0.0
      %630 = vmatpush2.msra.mxu0 %v534
      %631 = vmatprep.subr.mxu0 0.0
      %632 = vmatpush2.msra.mxu0 %v533
      %633 = vmatprep.subr.mxu0 0.0
      %634 = vmatpush2.msra.mxu0 %v532
      %635 = vmatprep.mubr.f32.mxu0 %v488
      %636 = vmatmul.mubr.f32.gmra.mxu0 %v500
      %v637 = vpop.f32.mrf.mxu0
      %v638 = vadd.f32 %v569, %v637
      %v639 = vpop.f32.mrf.mxu0
      %640 = vmatprep.mubr.f32.mxu0 %v489
      %641 = vmatmul.mubr.f32.gmra.mxu0 %v501
      %v642 = vpop.f32.mrf.mxu0
      %v643 = vadd.f32 %v569, %v642
      %v644 = vpop.f32.mrf.mxu0
      %645 = vmatprep.mubr.f32.mxu0 %v490
      %646 = vmatmul.mubr.f32.gmra.mxu0 %v502
      %v647 = vpop.f32.mrf.mxu0
      %v648 = vadd.f32 %v569, %v647
      %v649 = vpop.f32.mrf.mxu0
      %650 = vmatprep.mubr.f32.mxu0 %v491
      %651 = vmatmul.mubr.f32.gmra.mxu0 %v503
      %v652 = vpop.f32.mrf.mxu0
      %v653 = vadd.f32 %v569, %v652
      %v654 = vpop.f32.mrf.mxu0
      %655 = vdwg.mxu0
      %656 = vmatprep.subr.mxu0 0.0
      %657 = vmatpush1.msra.mxu0 %v563
      %658 = vmatprep.subr.mxu0 0.0
      %659 = vmatpush1.msra.mxu0 %v562
      %660 = vmatprep.subr.mxu0 0.0
      %661 = vmatpush1.msra.mxu0 %v561
      %662 = vmatprep.subr.mxu0 0.0
      %663 = vmatpush1.msra.mxu0 %v560
      %664 = vmatprep.subr.mxu0 0.0
      %665 = vmatpush1.msra.mxu0 %v559
      %666 = vmatprep.subr.mxu0 0.0
      %667 = vmatpush1.msra.mxu0 %v558
      %668 = vmatprep.subr.mxu0 0.0
      %669 = vmatpush1.msra.mxu0 %v557
      %670 = vmatprep.subr.mxu0 0.0
      %671 = vmatpush1.msra.mxu0 %v556
      %672 = vmatprep.subr.mxu0 0.0
      %673 = vmatpush1.msra.mxu0 %v555
      %674 = vmatprep.subr.mxu0 0.0
      %675 = vmatpush1.msra.mxu0 %v554
      %676 = vmatprep.subr.mxu0 0.0
      %677 = vmatpush1.msra.mxu0 %v553
      %678 = vmatprep.subr.mxu0 0.0
      %679 = vmatpush1.msra.mxu0 %v552
      %680 = vmatprep.subr.mxu0 0.0
      %681 = vmatpush1.msra.mxu0 %v551
      %682 = vmatprep.subr.mxu0 0.0
      %683 = vmatpush1.msra.mxu0 %v550
      %684 = vmatprep.subr.mxu0 0.0
      %685 = vmatpush1.msra.mxu0 %v549
      %686 = vmatprep.subr.mxu0 0.0
      %687 = vmatpush1.msra.mxu0 %v548
      %688 = vmatprep.subr.mxu0 0.0
      %689 = vmatpush2.msra.mxu0 0.0
      %690 = vmatprep.subr.mxu0 0.0
      %691 = vmatpush2.msra.mxu0 0.0
      %692 = vmatprep.subr.mxu0 0.0
      %693 = vmatpush2.msra.mxu0 0.0
      %694 = vmatprep.subr.mxu0 0.0
      %695 = vmatpush2.msra.mxu0 0.0
      %696 = vmatprep.subr.mxu0 0.0
      %697 = vmatpush2.msra.mxu0 0.0
      %698 = vmatprep.subr.mxu0 0.0
      %699 = vmatpush2.msra.mxu0 0.0
      %700 = vmatprep.subr.mxu0 0.0
      %701 = vmatpush2.msra.mxu0 0.0
      %702 = vmatprep.subr.mxu0 0.0
      %703 = vmatpush2.msra.mxu0 0.0
      %704 = vmatprep.subr.mxu0 0.0
      %705 = vmatpush2.msra.mxu0 0.0
      %706 = vmatprep.subr.mxu0 0.0
      %707 = vmatpush2.msra.mxu0 0.0
      %708 = vmatprep.subr.mxu0 0.0
      %709 = vmatpush2.msra.mxu0 0.0
      %710 = vmatprep.subr.mxu0 0.0
      %711 = vmatpush2.msra.mxu0 0.0
      %712 = vmatprep.subr.mxu0 0.0
      %713 = vmatpush2.msra.mxu0 0.0
      %714 = vmatprep.subr.mxu0 0.0
      %715 = vmatpush2.msra.mxu0 0.0
      %716 = vmatprep.subr.mxu0 0.0
      %717 = vmatpush2.msra.mxu0 0.0
      %718 = vmatprep.subr.mxu0 0.0
      %719 = vmatpush2.msra.mxu0 0.0
      %720 = vmatprep.mubr.f32.mxu0 0.0
      %721 = vmatmul.mubr.f32.gmra.mxu0 %v512
      %v722 = vpop.f32.mrf.mxu0
      %v723 = vadd.f32 %v638, %v722
      %v724 = vpop.f32.mrf.mxu0
      %725 = vmatprep.mubr.f32.mxu0 0.0
      %726 = vmatmul.mubr.f32.gmra.mxu0 %v513
      %v727 = vpop.f32.mrf.mxu0
      %v728 = vadd.f32 %v643, %v727
      %v729 = vpop.f32.mrf.mxu0
      %730 = vmatprep.mubr.f32.mxu0 0.0
      %731 = vmatmul.mubr.f32.gmra.mxu0 %v514
      %v732 = vpop.f32.mrf.mxu0
      %v733 = vadd.f32 %v648, %v732
      %v734 = vpop.f32.mrf.mxu0
      %735 = vmatprep.mubr.f32.mxu0 0.0
      %736 = vmatmul.mubr.f32.gmra.mxu0 %v515
      %v737 = vpop.f32.mrf.mxu0
      %v738 = vadd.f32 %v653, %v737
      %v739 = vpop.f32.mrf.mxu0
      %740 = vdwg.mxu0
      %741 = vst [vmem:[%s226] sm:$0xff] %v723
      %742 = vst [vmem:[%s226 + $0x8] sm:$0xff] %v728
      %743 = vst [vmem:[%s226 + $0x10] sm:$0xff] %v733
      %744 = vst [vmem:[%s226 + $0x18] sm:$0xff] %v738
      %s745 = smul.u32 4, %s16
      %p746 = scmp.lt.s32.totalorder %s745, 7
      %s747 = scalar_select %p746, %s745, 7
      %s748 = smul.addr %s747, 8
      %s749 = scalar_lea.vmem %s5, %s748
      // Predicated region
      $region41: #{ladder_block_pallas.3} parent=39 // pred_check
        %p750 = pneg %p144
      $region42: #{ladder_block_pallas.3} parent=39 // pred_check_branch
        %752 = sbr.rel (%p750) target = $region44
      $region43: #{ladder_block_pallas.3} parent=39 // pred_region
        %s753 = smul.u32 4, %s16
      $region44: #{ladder_block_pallas.3} parent=39 // pred_fallthru
        _
    $region40: #{ladder_block_pallas.3} parent=5 // pred_fallthru
      _
    %p754 = scmp.le.s32.totalorder 2, %s11
    // Predicated region
    $region45: #{ladder_block_pallas.3} parent=5 // pred_check
      %p755 = pneg %p754
    $region46: #{ladder_block_pallas.3} parent=5 // pred_check_branch
      %757 = sbr.rel (%p755) target = $region48
    $region47: #{ladder_block_pallas.3} parent=5 // pred_region
      %s758 = ssub.s32 %s11, 2
      // Predicated region
      $region49: #{ladder_block_pallas.3} parent=47 // pred_check
        %p759 = pneg %p150
      $region50: #{ladder_block_pallas.3} parent=47 // pred_check_branch
        %761 = sbr.rel (%p759) target = $region52
      $region51: #{ladder_block_pallas.3} parent=47 // pred_region
        %s762 = smul.u32 4, %s17
        %p763 = scmp.lt.s32.totalorder %s762, 7
        %s764 = scalar_select %p763, %s762, 7
        %s765 = smul.addr %s764, 8
        %s766 = scalar_lea.vmem %s5, %s765
      $region52: #{ladder_block_pallas.3} parent=47 // pred_fallthru
        _
    $region48: #{ladder_block_pallas.3} parent=5 // pred_fallthru
      _
  $region6: #{ladder_block_pallas.3} parent=0 // loop_footer
    %s15 = sadd.s32 1, %s11
  $region7: #{ladder_block_pallas.3} parent=0 // loop_footer_branch
    %10 = sbr.rel target = $region3
  $region8: #{ladder_block_pallas.3} parent=0 // loop_exit
    _

</llo_original>
